<compile_context>
chip_gen: v5e
topology: v5e:2x2
jax: 0.10.0
libtpu: 0.0.40
codegen_flags: <defaults>
</compile_context>

<pallas_src>
import jax
import jax.numpy as jnp
from jax.experimental import pallas as pl
from jax.experimental.pallas import tpu as pltpu

STATE_SIZE = 29
ACTION_SIZE = 3
HIDDEN1_UNITS = 300
HIDDEN2_UNITS = 600

# Lane-padded storage sizes (zero-filled padding; numerically identical).
H1_PAD = 384   # round_up(300, 128)
H2_PAD = 640   # round_up(600, 128)

MAX_TILE_B = 2048           # v7x-safe upper bound on rows per grid step


def _round_up(n, m):
    return (n + m - 1) // m * m


def _cdiv(n, m):
    return (n + m - 1) // m


def _soft_q_kernel(x_ref, a_ref, w1x_ref, w1a_ref, b1_ref, w2_ref, b2_ref,
                   w3_ref, b3_ref, o_ref):
    # fc1 (+ReLU): concat fused as a split layer.  State half runs on the MXU
    # (bf16 operands, f32 accumulation); the K=3 action half is 3 VPU FMAs in
    # f32 (a K=3 systolic pass would waste an entire MXU fill).
    h1 = jnp.dot(x_ref[...].astype(jnp.bfloat16), w1x_ref[...],
                 preferred_element_type=jnp.float32)
    a = a_ref[...]                                    # [tile_b, 3] f32
    for k in range(ACTION_SIZE):
        h1 = h1 + a[:, k:k + 1] * w1a_ref[k:k + 1, :]  # [tile_b,1]*[1,H1_PAD]
    h1 = jnp.maximum(h1 + b1_ref[...], 0.0)

    # fc2 (+ReLU): dominant MXU matmul, bf16 operands, f32 accumulation.
    h2 = jnp.dot(h1.astype(jnp.bfloat16), w2_ref[...],
                 preferred_element_type=jnp.float32)
    h2 = jnp.maximum(h2 + b2_ref[...], 0.0)

    # fc3: w3 is a lane-dense row vector [1, H2_PAD]; VPU mul + lane reduce
    # (padded lanes of h2 / w3 are zero, so they contribute nothing).
    q = jnp.sum(h2 * w3_ref[...].astype(jnp.float32), axis=-1, keepdims=True)
    o_ref[...] = (q + b3_ref[0]).astype(o_ref.dtype)   # b3 is an SMEM scalar


def soft_q_forward(x, a, params):
    """x: [B, STATE_SIZE] f32, a: [B, ACTION_SIZE] f32 -> q: [B, 1] f32."""
    w1x, w1a, b1, w2, b2, w3, b3 = params
    B = x.shape[0]

    # Batch tiling.
    #  * small batches: one sublane-aligned tile (no grid overhead at all).
    #  * large batches: balanced 128-aligned tiles, capped at MAX_TILE_B rows,
    #    and always >= 2 grid steps so v7x's two TensorCores both get work
    #    (the extra step costs ~0.35 us on single-TC v5e/v6e -- negligible).
    B_pad = _round_up(B, 8)
    if B_pad < 256:
        tile_b = B_pad
    else:
        n_steps = max(_cdiv(B_pad, MAX_TILE_B), 2)
        tile_b = _round_up(_cdiv(B_pad, n_steps), 128)
        B_pad = _round_up(B_pad, tile_b)
    if B_pad != B:
        x = jnp.pad(x, ((0, B_pad - B), (0, 0)))
        a = jnp.pad(a, ((0, B_pad - B), (0, 0)))
    grid = (B_pad // tile_b,)

    resident = lambda i: (0, 0)   # weights/biases: same block every grid step

    q = pl.pallas_call(
        _soft_q_kernel,
        out_shape=jax.ShapeDtypeStruct((B_pad, 1), jnp.float32),
        grid=grid,
        in_specs=[
            pl.BlockSpec((tile_b, STATE_SIZE), lambda i: (i, 0)),
            pl.BlockSpec((tile_b, ACTION_SIZE), lambda i: (i, 0)),
            pl.BlockSpec((STATE_SIZE, H1_PAD), resident),
            pl.BlockSpec((ACTION_SIZE, H1_PAD), resident),
            pl.BlockSpec((1, H1_PAD), resident),
            pl.BlockSpec((H1_PAD, H2_PAD), resident),
            pl.BlockSpec((1, H2_PAD), resident),
            pl.BlockSpec((1, H2_PAD), resident),
            pl.BlockSpec(memory_space=pltpu.MemorySpace.SMEM),   # b3 scalar
        ],
        out_specs=pl.BlockSpec((tile_b, 1), lambda i: (i, 0)),
        compiler_params=pltpu.CompilerParams(
            dimension_semantics=("parallel",),
            vmem_limit_bytes=48 * 1024 * 1024,   # <= v7x 64 MiB/TC physical
        ),
    )(x, a, w1x, w1a, b1, w2, b2, w3, b3)

    if B_pad != B:
        q = q[:B]
    return q


def _xavier_uniform(key, fan_in, fan_out, dtype=jnp.float32):
    limit = (6.0 / (fan_in + fan_out)) ** 0.5
    # stored [in, out] (transposed relative to nn.Linear.weight)
    return jax.random.uniform(key, (fan_in, fan_out), dtype, -limit, limit)


def init_params(key):
    k1, k2, k3 = jax.random.split(key, 3)
    in_dim = STATE_SIZE + ACTION_SIZE

    # Logical (PyTorch-equivalent) xavier-uniform weights, zero biases.
    w1 = _xavier_uniform(k1, in_dim, HIDDEN1_UNITS)          # [32, 300]
    w2 = _xavier_uniform(k2, HIDDEN1_UNITS, HIDDEN2_UNITS)   # [300, 600]
    w3 = _xavier_uniform(k3, HIDDEN2_UNITS, 1)               # [600, 1]

    # Zero-pad hidden dims to lane multiples (padding stays zero through the
    # whole network, so outputs are unchanged).
    w1p = jnp.zeros((in_dim, H1_PAD), jnp.float32).at[:, :HIDDEN1_UNITS].set(w1)
    w2p = (jnp.zeros((H1_PAD, H2_PAD), jnp.float32)
           .at[:HIDDEN1_UNITS, :HIDDEN2_UNITS].set(w2))
    w3p = jnp.zeros((1, H2_PAD), jnp.float32).at[0, :HIDDEN2_UNITS].set(w3[:, 0])

    # Split fc1 weight by input (state rows vs. action rows) so the kernel can
    # fuse the concat.  State half feeds the MXU (bf16, f32 accumulation); the
    # 3-row action half stays f32 for the in-kernel VPU FMAs.
    w1x = w1p[:STATE_SIZE].astype(jnp.bfloat16)    # [29, 384] bf16
    w1a = w1p[STATE_SIZE:]                          # [3, 384]  f32
    b1 = jnp.zeros((1, H1_PAD), jnp.float32)
    b2 = jnp.zeros((1, H2_PAD), jnp.float32)
    b3 = jnp.zeros((1,), jnp.float32)               # SMEM scalar
    return (w1x, w1a, b1, w2p.astype(jnp.bfloat16), b2,
            w3p.astype(jnp.bfloat16), b3)


def reference_forward(x, a, params):
    """Pure-JAX reference with the same bf16-operand / f32-accum precision.

    Note: bf16 rounding of x, h1 and the fc1/fc2/fc3 weights deviates from the
    f32 PyTorch model by ~1e-2 relative; acceptable for an RL critic.
    """
    w1x, w1a, b1, w2, b2, w3, b3 = params
    h1 = jnp.dot(x.astype(jnp.bfloat16), w1x, preferred_element_type=jnp.float32)
    for k in range(ACTION_SIZE):
        h1 = h1 + a[:, k:k + 1] * w1a[k:k + 1, :]
    h1 = jnp.maximum(h1 + b1, 0.0)
    h2 = jnp.dot(h1.astype(jnp.bfloat16), w2, preferred_element_type=jnp.float32)
    h2 = jnp.maximum(h2 + b2, 0.0)
    return jnp.sum(h2 * w3.astype(jnp.float32), axis=-1, keepdims=True) + b3[0]


if __name__ == "__main__":
    key = jax.random.PRNGKey(0)
    kp, kx, ka = jax.random.split(key, 3)

    params = init_params(kp)

    # Small deterministic check (single tile path).
    batch = 8
    x = jax.random.normal(kx, (batch, STATE_SIZE), jnp.float32)
    a = jax.random.normal(ka, (batch, ACTION_SIZE), jnp.float32)

    q = soft_q_forward(x, a, params)
    jax.block_until_ready(q)
    q_ref = reference_forward(x, a, params)
    assert q.shape == (batch, 1)
    assert jnp.allclose(q, q_ref, atol=5e-3, rtol=5e-3), (q, q_ref)

    # Larger check exercising the multi-tile / balanced-grid path.
    batch2 = 300
    x2 = jax.random.normal(kx, (batch2, STATE_SIZE), jnp.float32)
    a2 = jax.random.normal(ka, (batch2, ACTION_SIZE), jnp.float32)
    q2 = soft_q_forward(x2, a2, params)
    jax.block_until_ready(q2)
    q2_ref = reference_forward(x2, a2, params)
    assert q2.shape == (batch2, 1)
    assert jnp.allclose(q2, q2_ref, atol=5e-3, rtol=5e-3)

    print("KERNEL_OK")
</pallas_src>

<mosaic_0001>
module attributes {stable_mosaic.version = 11 : i64} {
  func.func @_soft_q_kernel(%arg0: i32, %arg1: memref<8x29xf32, #tpu.memory_space<vmem>>, %arg2: memref<8x3xf32, #tpu.memory_space<vmem>>, %arg3: memref<29x384xbf16, #tpu.memory_space<vmem>>, %arg4: memref<3x384xf32, #tpu.memory_space<vmem>>, %arg5: memref<1x384xf32, #tpu.memory_space<vmem>>, %arg6: memref<384x640xbf16, #tpu.memory_space<vmem>>, %arg7: memref<1x640xf32, #tpu.memory_space<vmem>>, %arg8: memref<1x640xbf16, #tpu.memory_space<vmem>>, %arg9: memref<1xf32, #tpu.memory_space<smem>>, %arg10: memref<8x1xf32, #tpu.memory_space<vmem>>) attributes {dimension_semantics = [#tpu.dimension_semantics<parallel>], iteration_bounds = array<i64: 1>, scalar_prefetch = 0 : i64, scratch_operands = 0 : i64, tpu.core_type = #tpu.core_type<tc>, window_params = [{transform_indices = @transform_0, window_bounds = array<i64: 8, 29>}, {transform_indices = @transform_1, window_bounds = array<i64: 8, 3>}, {pipeline_mode = #tpu.pipeline_mode<synchronous>, transform_indices = @transform_2, window_bounds = array<i64: 29, 384>}, {pipeline_mode = #tpu.pipeline_mode<synchronous>, transform_indices = @transform_3, window_bounds = array<i64: 3, 384>}, {pipeline_mode = #tpu.pipeline_mode<synchronous>, transform_indices = @transform_4, window_bounds = array<i64: 1, 384>}, {pipeline_mode = #tpu.pipeline_mode<synchronous>, transform_indices = @transform_5, window_bounds = array<i64: 384, 640>}, {pipeline_mode = #tpu.pipeline_mode<synchronous>, transform_indices = @transform_6, window_bounds = array<i64: 1, 640>}, {pipeline_mode = #tpu.pipeline_mode<synchronous>, transform_indices = @transform_7, window_bounds = array<i64: 1, 640>}, {transform_indices = @transform_8, window_bounds = array<i64: 1>}, {transform_indices = @transform_9, window_bounds = array<i64: 8, 1>}]} {
    %c0 = arith.constant 0 : index
    %c0_0 = arith.constant 0 : index
    %0 = vector.load %arg1[%c0, %c0_0] : memref<8x29xf32, #tpu.memory_space<vmem>>, vector<8x29xf32>
    %1 = arith.truncf %0 : vector<8x29xf32> to vector<8x29xbf16>
    %c0_1 = arith.constant 0 : index
    %c0_2 = arith.constant 0 : index
    %2 = vector.load %arg3[%c0_1, %c0_2] : memref<29x384xbf16, #tpu.memory_space<vmem>>, vector<29x384xbf16>
    %cst = arith.constant dense<0.000000e+00> : vector<8x384xf32>
    %3 = tpu.matmul %1, %2, %cst {dimension_numbers = #tpu.dot_dimension_numbers<[1], [0], [0], [1], [0, 0, 1, 1], [], []>} : vector<8x29xbf16>, vector<29x384xbf16>, vector<8x384xf32> -> vector<8x384xf32>
    %c0_3 = arith.constant 0 : index
    %c0_4 = arith.constant 0 : index
    %4 = vector.load %arg2[%c0_3, %c0_4] : memref<8x3xf32, #tpu.memory_space<vmem>>, vector<8x3xf32>
    %5 = vector.extract_strided_slice %4 {offsets = [0, 0], sizes = [8, 1], strides = [1, 1]} : vector<8x3xf32> to vector<8x1xf32>
    %c0_5 = arith.constant 0 : index
    %c0_6 = arith.constant 0 : index
    %6 = vector.load %arg4[%c0_5, %c0_6] : memref<3x384xf32, #tpu.memory_space<vmem>>, vector<1x384xf32>
    %7 = vector.broadcast %5 : vector<8x1xf32> to vector<8x384xf32>
    %8 = vector.broadcast %6 : vector<1x384xf32> to vector<8x384xf32>
    %9 = arith.mulf %7, %8 : vector<8x384xf32>
    %10 = arith.addf %3, %9 : vector<8x384xf32>
    %11 = vector.extract_strided_slice %4 {offsets = [0, 1], sizes = [8, 1], strides = [1, 1]} : vector<8x3xf32> to vector<8x1xf32>
    %c1 = arith.constant 1 : index
    %c0_7 = arith.constant 0 : index
    %12 = vector.load %arg4[%c1, %c0_7] : memref<3x384xf32, #tpu.memory_space<vmem>>, vector<1x384xf32>
    %13 = vector.broadcast %11 : vector<8x1xf32> to vector<8x384xf32>
    %14 = vector.broadcast %12 : vector<1x384xf32> to vector<8x384xf32>
    %15 = arith.mulf %13, %14 : vector<8x384xf32>
    %16 = arith.addf %10, %15 : vector<8x384xf32>
    %17 = vector.extract_strided_slice %4 {offsets = [0, 2], sizes = [8, 1], strides = [1, 1]} : vector<8x3xf32> to vector<8x1xf32>
    %c2 = arith.constant 2 : index
    %c0_8 = arith.constant 0 : index
    %18 = vector.load %arg4[%c2, %c0_8] : memref<3x384xf32, #tpu.memory_space<vmem>>, vector<1x384xf32>
    %19 = vector.broadcast %17 : vector<8x1xf32> to vector<8x384xf32>
    %20 = vector.broadcast %18 : vector<1x384xf32> to vector<8x384xf32>
    %21 = arith.mulf %19, %20 : vector<8x384xf32>
    %22 = arith.addf %16, %21 : vector<8x384xf32>
    %c0_9 = arith.constant 0 : index
    %c0_10 = arith.constant 0 : index
    %23 = vector.load %arg5[%c0_9, %c0_10] : memref<1x384xf32, #tpu.memory_space<vmem>>, vector<1x384xf32>
    %24 = vector.broadcast %23 : vector<1x384xf32> to vector<8x384xf32>
    %25 = arith.addf %22, %24 : vector<8x384xf32>
    %cst_11 = arith.constant 0.000000e+00 : f32
    %26 = vector.broadcast %cst_11 : f32 to vector<8x384xf32>
    %27 = arith.maximumf %25, %26 : vector<8x384xf32>
    %28 = arith.truncf %27 : vector<8x384xf32> to vector<8x384xbf16>
    %c0_12 = arith.constant 0 : index
    %c0_13 = arith.constant 0 : index
    %29 = vector.load %arg6[%c0_12, %c0_13] : memref<384x640xbf16, #tpu.memory_space<vmem>>, vector<384x640xbf16>
    %cst_14 = arith.constant dense<0.000000e+00> : vector<8x640xf32>
    %30 = tpu.matmul %28, %29, %cst_14 {dimension_numbers = #tpu.dot_dimension_numbers<[1], [0], [0], [1], [0, 0, 1, 1], [], []>} : vector<8x384xbf16>, vector<384x640xbf16>, vector<8x640xf32> -> vector<8x640xf32>
    %c0_15 = arith.constant 0 : index
    %c0_16 = arith.constant 0 : index
    %31 = vector.load %arg7[%c0_15, %c0_16] : memref<1x640xf32, #tpu.memory_space<vmem>>, vector<1x640xf32>
    %32 = vector.broadcast %31 : vector<1x640xf32> to vector<8x640xf32>
    %33 = arith.addf %30, %32 : vector<8x640xf32>
    %cst_17 = arith.constant 0.000000e+00 : f32
    %34 = vector.broadcast %cst_17 : f32 to vector<8x640xf32>
    %35 = arith.maximumf %33, %34 : vector<8x640xf32>
    %c0_18 = arith.constant 0 : index
    %c0_19 = arith.constant 0 : index
    %36 = vector.load %arg8[%c0_18, %c0_19] : memref<1x640xbf16, #tpu.memory_space<vmem>>, vector<1x640xbf16>
    %37 = arith.extf %36 : vector<1x640xbf16> to vector<1x640xf32>
    %38 = vector.broadcast %37 : vector<1x640xf32> to vector<8x640xf32>
    %39 = arith.mulf %35, %38 : vector<8x640xf32>
    %cst_20 = arith.constant dense<0.000000e+00> : vector<8xf32>
    %40 = vector.multi_reduction <add>, %39, %cst_20 [1] : vector<8x640xf32> to vector<8xf32>
    %41 = vector.shape_cast %40 : vector<8xf32> to vector<8x1xf32>
    %c0_21 = arith.constant 0 : index
    %42 = memref.load %arg9[%c0_21] : memref<1xf32, #tpu.memory_space<smem>>
    %43 = vector.broadcast %42 : f32 to vector<8x1xf32>
    %44 = arith.addf %41, %43 : vector<8x1xf32>
    %c0_22 = arith.constant 0 : index
    %c0_23 = arith.constant 0 : index
    %45 = vector.load %arg10[%c0_22, %c0_23] : memref<8x1xf32, #tpu.memory_space<vmem>>, vector<8x1xf32>
    tpu.vector_store %arg10[%c0_22, %c0_23], %44 {strides = array<i32>} : memref<8x1xf32, #tpu.memory_space<vmem>>, vector<8x1xf32>,
    return
  }
  func.func @transform_0(%arg0: i32) -> (i32, i32) {
    %c0_i32 = arith.constant 0 : i32
    %c0_i32_0 = arith.constant 0 : i32
    return %arg0, %c0_i32 : i32, i32
  }
  func.func @transform_1(%arg0: i32) -> (i32, i32) {
    %c0_i32 = arith.constant 0 : i32
    %c0_i32_0 = arith.constant 0 : i32
    return %arg0, %c0_i32 : i32, i32
  }
  func.func @transform_2(%arg0: i32) -> (i32, i32) {
    %c0_i32 = arith.constant 0 : i32
    %c0_i32_0 = arith.constant 0 : i32
    %c0_i32_1 = arith.constant 0 : i32
    return %c0_i32, %c0_i32_0 : i32, i32
  }
  func.func @transform_3(%arg0: i32) -> (i32, i32) {
    %c0_i32 = arith.constant 0 : i32
    %c0_i32_0 = arith.constant 0 : i32
    %c0_i32_1 = arith.constant 0 : i32
    return %c0_i32, %c0_i32_0 : i32, i32
  }
  func.func @transform_4(%arg0: i32) -> (i32, i32) {
    %c0_i32 = arith.constant 0 : i32
    %c0_i32_0 = arith.constant 0 : i32
    %c0_i32_1 = arith.constant 0 : i32
    return %c0_i32, %c0_i32_0 : i32, i32
  }
  func.func @transform_5(%arg0: i32) -> (i32, i32) {
    %c0_i32 = arith.constant 0 : i32
    %c0_i32_0 = arith.constant 0 : i32
    %c0_i32_1 = arith.constant 0 : i32
    return %c0_i32, %c0_i32_0 : i32, i32
  }
  func.func @transform_6(%arg0: i32) -> (i32, i32) {
    %c0_i32 = arith.constant 0 : i32
    %c0_i32_0 = arith.constant 0 : i32
    %c0_i32_1 = arith.constant 0 : i32
    return %c0_i32, %c0_i32_0 : i32, i32
  }
  func.func @transform_7(%arg0: i32) -> (i32, i32) {
    %c0_i32 = arith.constant 0 : i32
    %c0_i32_0 = arith.constant 0 : i32
    %c0_i32_1 = arith.constant 0 : i32
    return %c0_i32, %c0_i32_0 : i32, i32
  }
  func.func @transform_8(%arg0: i32) -> i32 {
    %c0_i32 = arith.constant 0 : i32
    %c0_i32_0 = arith.constant 0 : i32
    return %c0_i32 : i32
  }
  func.func @transform_9(%arg0: i32) -> (i32, i32) {
    %c0_i32 = arith.constant 0 : i32
    %c0_i32_0 = arith.constant 0 : i32
    return %arg0, %c0_i32 : i32, i32
  }
}

</mosaic_0001>

<llo_original>
// kernel: tpu_custom_call.1
$region0: #{tpu_custom_call.1}
  #allocation0 [shape = 'u32[]', space=smem, size = 0x4, offset = 0x4, fixed_abs, tag = 'smem constant byte address 0x4 - core index']
  #allocation1 [shape = 'u32[72,128]{1,0:T(1,128)}', space=vmem, size = 0x9000, scoped, tag = 'internal scratch']
  #allocation2 [shape = 'f32[1]{0:T(128)S(6)}', space=smem, size = 0x200, scoped, tag = 'scoped memory for tpu_custom_call.1']
  %s0 = inlined_call_operand.hbm [shape: f32[8,29], index: 0, kind: input, shape index: {}]
  %s1 = inlined_call_operand.vmem [shape: f32[8,3], index: 1, kind: input, shape index: {}]
  %s2 = inlined_call_operand.hbm [shape: bf16[29,384], index: 2, kind: input, shape index: {}]
  %s3 = inlined_call_operand.vmem [shape: f32[3,384], index: 3, kind: input, shape index: {}]
  %s4 = inlined_call_operand.hbm [shape: f32[1,384], index: 4, kind: input, shape index: {}]
  %s5 = inlined_call_operand.hbm [shape: bf16[384,640], index: 5, kind: input, shape index: {}]
  %s6 = inlined_call_operand.vmem [shape: f32[1,640], index: 6, kind: input, shape index: {}]
  %s7 = inlined_call_operand.hbm [shape: bf16[1,640], index: 7, kind: input, shape index: {}]
  %s8 = inlined_call_operand.<no memory space> [shape: f32[1], index: 8, kind: input, shape index: {}]
  %s9 = inlined_call_operand.vmem [shape: f32[8,1], index: 9, kind: output, shape index: {}]
  %s10 = sld [smem:[#allocation0]]
  $region66: #{tpu_custom_call.1} parent=0
    _
  %s12 = ssub.s32 1, %s10
  %s13 = scalar_select 0, %s12, %s10
  %14 = sst [smem:[#allocation2]] %s8
  $region1: #{tpu_custom_call.1} parent=0
    #allocation3 [shape = 'u8[4096]{0}', space=vmem, size = 0x1000, scoped, tag = 'input window, operand 0, single buffered']
    #allocation4 [shape = 's32[1]{0}', space=sflag, size = 0x4, scoped, tag = 'scoped memory for tpu_custom_call.1']
    #allocation5 [shape = 'u8[24576]{0}', space=vmem, size = 0x6000, scoped, tag = 'input window, operand 2, single buffered']
    #allocation6 [shape = 's32[1]{0}', space=sflag, size = 0x4, scoped, tag = 'scoped memory for tpu_custom_call.1']
    #allocation7 [shape = 'u8[1536]{0}', space=vmem, size = 0x800, scoped, tag = 'input window, operand 4, single buffered']
    #allocation8 [shape = 'u8[491520]{0}', space=vmem, size = 0x78000, scoped, tag = 'input window, operand 5, single buffered']
    #allocation9 [shape = 's32[1]{0}', space=sflag, size = 0x4, scoped, tag = 'scoped memory for tpu_custom_call.1']
    #allocation10 [shape = 'u8[2560]{0}', space=vmem, size = 0xc00, scoped, tag = 'input window, operand 7, single buffered']
    %15 = vsyncpa [#allocation4], 0
    %16 = vsyncpa [#allocation6], 0
    %17 = vsyncpa [#allocation9], 0
    // Predicated region
    $region2: #{tpu_custom_call.1} parent=1 // pred_check
      _
    $region3: #{tpu_custom_call.1} parent=1 // pred_check_branch
      %19 = sbr.rel (0) target = $region5
    $region4: #{tpu_custom_call.1} parent=1 // pred_region
      %21 = vsyncadd [#allocation4], 0
      %s23 = sshll.u32 %s0, 4
      %s24 = int_to_ptr.hbm [resolvable:$true] %s23
      %s25 = sshll.u32 [#allocation3], 4
      %s26 = int_to_ptr.vmem [resolvable:$true] %s25
      %28 = dma.hbm_to_vmem [thread:$0]  %s24, 128, %s26, [#allocation4]
    $region5: #{tpu_custom_call.1} parent=1 // pred_fallthru
      _
    // Predicated region
    $region6: #{tpu_custom_call.1} parent=1 // pred_check
      _
    $region7: #{tpu_custom_call.1} parent=1 // pred_check_branch
      %30 = sbr.rel (0) target = $region9
    $region8: #{tpu_custom_call.1} parent=1 // pred_region
      _
    $region9: #{tpu_custom_call.1} parent=1 // pred_fallthru
      _
    // Predicated region
    $region10: #{tpu_custom_call.1} parent=1 // pred_check
      _
    $region11: #{tpu_custom_call.1} parent=1 // pred_check_branch
      %32 = sbr.rel (0) target = $region13
    $region12: #{tpu_custom_call.1} parent=1 // pred_region
      %34 = vsyncadd [#allocation6], 0
      %s35 = sshll.u32 %s2, 4
      %s36 = int_to_ptr.hbm [resolvable:$true] %s35
      %s37 = sshll.u32 [#allocation5], 4
      %s38 = int_to_ptr.vmem [resolvable:$true] %s37
      %43 = dma.hbm_to_vmem [thread:$0]  %s36, 768, %s38, [#allocation6], 192, 192, 12
    $region13: #{tpu_custom_call.1} parent=1 // pred_fallthru
      _
    // Predicated region
    $region14: #{tpu_custom_call.1} parent=1 // pred_check
      _
    $region15: #{tpu_custom_call.1} parent=1 // pred_check_branch
      %45 = sbr.rel (0) target = $region17
    $region16: #{tpu_custom_call.1} parent=1 // pred_region
      _
    $region17: #{tpu_custom_call.1} parent=1 // pred_fallthru
      _
    // Predicated region
    $region18: #{tpu_custom_call.1} parent=1 // pred_check
      _
    $region19: #{tpu_custom_call.1} parent=1 // pred_check_branch
      %47 = sbr.rel (0) target = $region21
    $region20: #{tpu_custom_call.1} parent=1 // pred_region
      %49 = vsyncadd [#allocation6], 0
      %s51 = sshll.u32 %s4, 4
      %s52 = int_to_ptr.hbm [resolvable:$true] %s51
      %s53 = sshll.u32 [#allocation7], 4
      %s54 = int_to_ptr.vmem [resolvable:$true] %s53
      %56 = dma.hbm_to_vmem [thread:$0]  %s52, 48, %s54, [#allocation6]
    $region21: #{tpu_custom_call.1} parent=1 // pred_fallthru
      _
    // Predicated region
    $region22: #{tpu_custom_call.1} parent=1 // pred_check
      _
    $region23: #{tpu_custom_call.1} parent=1 // pred_check_branch
      %58 = sbr.rel (0) target = $region25
    $region24: #{tpu_custom_call.1} parent=1 // pred_region
      %60 = vsyncadd [#allocation9], 0
      %s61 = sshll.u32 %s5, 4
      %s62 = int_to_ptr.hbm [resolvable:$true] %s61
      %s63 = sshll.u32 [#allocation8], 4
      %s64 = int_to_ptr.vmem [resolvable:$true] %s63
      %69 = dma.hbm_to_vmem [thread:$0]  %s62, 15360, %s64, [#allocation9], 320, 320, 20
    $region25: #{tpu_custom_call.1} parent=1 // pred_fallthru
      _
    // Predicated region
    $region26: #{tpu_custom_call.1} parent=1 // pred_check
      _
    $region27: #{tpu_custom_call.1} parent=1 // pred_check_branch
      %71 = sbr.rel (0) target = $region29
    $region28: #{tpu_custom_call.1} parent=1 // pred_region
      _
    $region29: #{tpu_custom_call.1} parent=1 // pred_fallthru
      _
    // Predicated region
    $region30: #{tpu_custom_call.1} parent=1 // pred_check
      _
    $region31: #{tpu_custom_call.1} parent=1 // pred_check_branch
      %73 = sbr.rel (0) target = $region33
    $region32: #{tpu_custom_call.1} parent=1 // pred_region
      %75 = vsyncadd [#allocation9], 0
      %s77 = sshll.u32 %s7, 4
      %s78 = int_to_ptr.hbm [resolvable:$true] %s77
      %s79 = sshll.u32 [#allocation10], 4
      %s80 = int_to_ptr.vmem [resolvable:$true] %s79
      %82 = dma.hbm_to_vmem [thread:$0]  %s78, 80, %s80, [#allocation9]
    $region33: #{tpu_custom_call.1} parent=1 // pred_fallthru
      _
    // Predicated region
    $region34: #{tpu_custom_call.1} parent=1 // pred_check
      _
    $region35: #{tpu_custom_call.1} parent=1 // pred_check_branch
      %84 = sbr.rel (0) target = $region37
    $region36: #{tpu_custom_call.1} parent=1 // pred_region
      _
    $region37: #{tpu_custom_call.1} parent=1 // pred_fallthru
      _
    // Predicated region
    $region38: #{tpu_custom_call.1} parent=1 // pred_check
      _
    $region39: #{tpu_custom_call.1} parent=1 // pred_check_branch
      %86 = sbr.rel (0) target = $region41
    $region40: #{tpu_custom_call.1} parent=1 // pred_region
      %88 = dma.done [#allocation4], 128
    $region41: #{tpu_custom_call.1} parent=1 // pred_fallthru
      _
    // Predicated region
    $region42: #{tpu_custom_call.1} parent=1 // pred_check
      _
    $region43: #{tpu_custom_call.1} parent=1 // pred_check_branch
      %90 = sbr.rel (0) target = $region45
    $region44: #{tpu_custom_call.1} parent=1 // pred_region
      %92 = dma.done [#allocation6], 768
    $region45: #{tpu_custom_call.1} parent=1 // pred_fallthru
      _
    // Predicated region
    $region46: #{tpu_custom_call.1} parent=1 // pred_check
      _
    $region47: #{tpu_custom_call.1} parent=1 // pred_check_branch
      %94 = sbr.rel (0) target = $region49
    $region48: #{tpu_custom_call.1} parent=1 // pred_region
      %96 = dma.done [#allocation6], 48
    $region49: #{tpu_custom_call.1} parent=1 // pred_fallthru
      _
    // Predicated region
    $region50: #{tpu_custom_call.1} parent=1 // pred_check
      _
    $region51: #{tpu_custom_call.1} parent=1 // pred_check_branch
      %98 = sbr.rel (0) target = $region53
    $region52: #{tpu_custom_call.1} parent=1 // pred_region
      %100 = dma.done [#allocation9], 15360
    $region53: #{tpu_custom_call.1} parent=1 // pred_fallthru
      _
    // Predicated region
    $region54: #{tpu_custom_call.1} parent=1 // pred_check
      _
    $region55: #{tpu_custom_call.1} parent=1 // pred_check_branch
      %102 = sbr.rel (0) target = $region57
    $region56: #{tpu_custom_call.1} parent=1 // pred_region
      %104 = dma.done [#allocation9], 80
    $region57: #{tpu_custom_call.1} parent=1 // pred_fallthru
      _
    %v106 = vld [vmem:[#allocation3] sm:$0xff]
    %v107 = vpack.c.bf16 %v106, %v106
    %v108 = vld [vmem:[#allocation5] sm:$0xff]
    %v109 = vld [vmem:[#allocation5 + $0x8] sm:$0xf]
    %v110 = vld [vmem:[#allocation5 + $0xc] sm:$0xff]
    %v111 = vld [vmem:[#allocation5 + $0x14] sm:$0xf]
    %v112 = vld [vmem:[#allocation5 + $0x18] sm:$0xff]
    %v113 = vld [vmem:[#allocation5 + $0x20] sm:$0xf]
    %v114 = vld [vmem:[#allocation5 + $0x24] sm:$0x77]
    %v115 = vld [vmem:[#allocation5 + $0x2c] sm:$0x7]
    %v116 = vld [vmem:[%s1] sm:$0xff]
    %v117 = vld [vmem:[%s3] ss:$4 sm:$0x7]
    %119 = vset.pattern.permute.xlu0 0
    %120 = vperm.xlu0 %119, %v116
    %v121 = vpop.permute.xlu0 %120
    %v124 = vperm.slane %v117, 0
    %v125 = vperm.slane %v117, 1
    %v126 = vperm.slane %v117, 2
    %v130 = vmul.f32 %v121, %v124
    %v131 = vmul.f32 %v121, %v125
    %v132 = vmul.f32 %v121, %v126
    %v141 = vunpack.c.l.b16 %v108
    %v142 = vunpack.c.h.b16 %v108
    %v143 = vunpack.c.l.b16 %v109
    %v144 = vunpack.c.l.b16 %v110
    %v145 = vunpack.c.h.b16 %v110
    %v146 = vunpack.c.l.b16 %v111
    %v147 = vunpack.c.l.b16 %v112
    %v148 = vunpack.c.h.b16 %v112
    %v149 = vunpack.c.l.b16 %v113
    %v150 = vunpack.c.l.b16 %v114
    %v151 = vunpack.c.h.b16 %v114
    %v152 = vunpack.c.l.b16 %v115
    %v153 = vpack.c.b16 %v144, %v141
    %v154 = vpack.c.b16 %v145, %v142
    %v155 = vpack.c.b16 %v146, %v143
    %v156 = vpack.c.b16 %v150, %v147
    %v157 = vpack.c.b16 %v151, %v148
    %v158 = vpack.c.b16 %v152, %v149
    %vm162 = vcmask 236544
    %v164 = vsel %vm162, %v107, 0
    %vm166 = vcmask 1045504
    %vm167 = vcmask 1046528
    %v168 = vsel %vm166, 4294967295, 65535
    %v169 = vsel %vm167, %v168, 0
    %v171 = vand.u32 %v156, %v169
    %v174 = vand.u32 %v157, %v169
    %v177 = vand.u32 %v158, %v169
    %179 = vmatpush.bf16.msra.mxu0 0
    %180 = vmatpush.bf16.msra.mxu0 0
    %181 = vmatpush.bf16.msra.mxu0 0
    %182 = vmatpush.bf16.msra.mxu0 0
    %183 = vmatpush.bf16.msra.mxu0 0
    %184 = vmatpush.bf16.msra.mxu0 0
    %185 = vmatpush.bf16.msra.mxu0 %v171
    %186 = vmatpush.bf16.msra.mxu0 %v153
    %187 = vmatmul.bf16.gmra.mxu0 %v164
    %v188 = vpop.f32.mrf.mxu0
    %v189 = vadd.f32 %v130, %v188
    %v190 = vpop.f32.mrf.mxu0
    %191 = vdwg.mxu0
    %192 = vmatpush.bf16.msra.mxu0 0
    %193 = vmatpush.bf16.msra.mxu0 0
    %194 = vmatpush.bf16.msra.mxu0 0
    %195 = vmatpush.bf16.msra.mxu0 0
    %196 = vmatpush.bf16.msra.mxu0 0
    %197 = vmatpush.bf16.msra.mxu0 0
    %198 = vmatpush.bf16.msra.mxu0 %v174
    %199 = vmatpush.bf16.msra.mxu0 %v154
    %200 = vmatmul.bf16.gmra.mxu0 %v164
    %v201 = vpop.f32.mrf.mxu0
    %v202 = vadd.f32 %v131, %v201
    %v203 = vpop.f32.mrf.mxu0
    %204 = vdwg.mxu0
    %205 = vmatpush.bf16.msra.mxu0 0
    %206 = vmatpush.bf16.msra.mxu0 0
    %207 = vmatpush.bf16.msra.mxu0 0
    %208 = vmatpush.bf16.msra.mxu0 0
    %209 = vmatpush.bf16.msra.mxu0 0
    %210 = vmatpush.bf16.msra.mxu0 0
    %211 = vmatpush.bf16.msra.mxu0 %v177
    %212 = vmatpush.bf16.msra.mxu0 %v155
    %213 = vmatmul.bf16.gmra.mxu0 %v164
    %v214 = vpop.f32.mrf.mxu0
    %v215 = vadd.f32 %v132, %v214
    %v216 = vpop.f32.mrf.mxu0
    %217 = vdwg.mxu0
    %s218 = scalar_lea.vmem %s3, 1
    %v219 = vld [vmem:[%s218] ss:$4 sm:$0x7]
    %220 = vset.pattern.permute.xlu0 1
    %221 = vperm.xlu0 %220, %v116
    %v222 = vpop.permute.xlu0 %221
    %v225 = vperm.slane %v219, 0
    %v226 = vperm.slane %v219, 1
    %v227 = vperm.slane %v219, 2
    %v231 = vmul.f32 %v222, %v225
    %v232 = vmul.f32 %v222, %v226
    %v233 = vmul.f32 %v222, %v227
    %v234 = vadd.f32 %v189, %v231
    %v235 = vadd.f32 %v202, %v232
    %v236 = vadd.f32 %v215, %v233
    %s237 = scalar_lea.vmem %s3, 2
    %v238 = vld [vmem:[%s237] ss:$4 sm:$0x7]
    %239 = vset.pattern.permute.xlu0 2
    %240 = vperm.xlu0 %239, %v116
    %v241 = vpop.permute.xlu0 %240
    %v244 = vperm.slane %v238, 0
    %v245 = vperm.slane %v238, 1
    %v246 = vperm.slane %v238, 2
    %v250 = vmul.f32 %v241, %v244
    %v251 = vmul.f32 %v241, %v245
    %v252 = vmul.f32 %v241, %v246
    %v253 = vadd.f32 %v234, %v250
    %v254 = vadd.f32 %v235, %v251
    %v255 = vadd.f32 %v236, %v252
    %v256 = vld [vmem:[#allocation7] sm:$0x7]
    %v258 = vperm.slane %v256, 0
    %v259 = vperm.slane %v256, 1
    %v260 = vperm.slane %v256, 2
    %v264 = vadd.f32 %v253, %v258
    %v265 = vadd.f32 %v254, %v259
    %v266 = vadd.f32 %v255, %v260
    %v267 = vmax.f32 %v264, 0.0
    %v268 = vmax.f32 %v265, 0.0
    %v269 = vmax.f32 %v266, 0.0
    %v270 = vpack.c.bf16 %v267, %v267
    %v271 = vpack.c.bf16 %v268, %v268
    %v272 = vpack.c.bf16 %v269, %v269
    %v273 = vld [vmem:[#allocation8] sm:$0xff]
    %v274 = vld [vmem:[#allocation8 + $0x8] sm:$0xff]
    %v275 = vld [vmem:[#allocation8 + $0x10] sm:$0xf]
    %v276 = vld [vmem:[#allocation8 + $0x14] sm:$0xff]
    %v277 = vld [vmem:[#allocation8 + $0x1c] sm:$0xff]
    %v278 = vld [vmem:[#allocation8 + $0x24] sm:$0xf]
    %v279 = vld [vmem:[#allocation8 + $0x28] sm:$0xff]
    %v280 = vld [vmem:[#allocation8 + $0x30] sm:$0xff]
    %v281 = vld [vmem:[#allocation8 + $0x38] sm:$0xf]
    %v282 = vld [vmem:[#allocation8 + $0x3c] sm:$0xff]
    %v283 = vld [vmem:[#allocation8 + $0x44] sm:$0xff]
    %v284 = vld [vmem:[#allocation8 + $0x4c] sm:$0xf]
    %v285 = vld [vmem:[#allocation8 + $0x50] sm:$0xff]
    %v286 = vld [vmem:[#allocation8 + $0x58] sm:$0xff]
    %v287 = vld [vmem:[#allocation8 + $0x60] sm:$0xf]
    %v288 = vld [vmem:[#allocation8 + $0x64] sm:$0xff]
    %v289 = vld [vmem:[#allocation8 + $0x6c] sm:$0xff]
    %v290 = vld [vmem:[#allocation8 + $0x74] sm:$0xf]
    %v291 = vld [vmem:[#allocation8 + $0x78] sm:$0xff]
    %v292 = vld [vmem:[#allocation8 + $0x80] sm:$0xff]
    %v293 = vld [vmem:[#allocation8 + $0x88] sm:$0xf]
    %v294 = vld [vmem:[#allocation8 + $0x8c] sm:$0xff]
    %v295 = vld [vmem:[#allocation8 + $0x94] sm:$0xff]
    %v296 = vld [vmem:[#allocation8 + $0x9c] sm:$0xf]
    %v297 = vld [vmem:[#allocation8 + $0xa0] sm:$0xff]
    %v298 = vld [vmem:[#allocation8 + $0xa8] sm:$0xff]
    %v299 = vld [vmem:[#allocation8 + $0xb0] sm:$0xf]
    %v300 = vld [vmem:[#allocation8 + $0xb4] sm:$0xff]
    %v301 = vld [vmem:[#allocation8 + $0xbc] sm:$0xff]
    %v302 = vld [vmem:[#allocation8 + $0xc4] sm:$0xf]
    %v303 = vld [vmem:[#allocation8 + $0xc8] sm:$0xff]
    %v304 = vld [vmem:[#allocation8 + $0xd0] sm:$0xff]
    %v305 = vld [vmem:[#allocation8 + $0xd8] sm:$0xf]
    %v306 = vld [vmem:[#allocation8 + $0xdc] sm:$0xff]
    %v307 = vld [vmem:[#allocation8 + $0xe4] sm:$0xff]
    %v308 = vld [vmem:[#allocation8 + $0xec] sm:$0xf]
    %v309 = vld [vmem:[#allocation8 + $0xf0] sm:$0xff]
    %v310 = vld [vmem:[#allocation8 + $0xf8] sm:$0xff]
    %v311 = vld [vmem:[#allocation8 + $0x100] sm:$0xf]
    %v312 = vld [vmem:[#allocation8 + $0x104] sm:$0xff]
    %v313 = vld [vmem:[#allocation8 + $0x10c] sm:$0xff]
    %v314 = vld [vmem:[#allocation8 + $0x114] sm:$0xf]
    %v315 = vld [vmem:[#allocation8 + $0x118] sm:$0xff]
    %v316 = vld [vmem:[#allocation8 + $0x120] sm:$0xff]
    %v317 = vld [vmem:[#allocation8 + $0x128] sm:$0xf]
    %v318 = vld [vmem:[#allocation8 + $0x12c] sm:$0xff]
    %v319 = vld [vmem:[#allocation8 + $0x134] sm:$0xff]
    %v320 = vld [vmem:[#allocation8 + $0x13c] sm:$0xf]
    %v321 = vld [vmem:[#allocation8 + $0x140] sm:$0xff]
    %v322 = vld [vmem:[#allocation8 + $0x148] sm:$0xff]
    %v323 = vld [vmem:[#allocation8 + $0x150] sm:$0xf]
    %v324 = vld [vmem:[#allocation8 + $0x154] sm:$0xff]
    %v325 = vld [vmem:[#allocation8 + $0x15c] sm:$0xff]
    %v326 = vld [vmem:[#allocation8 + $0x164] sm:$0xf]
    %v327 = vld [vmem:[#allocation8 + $0x168] sm:$0xff]
    %v328 = vld [vmem:[#allocation8 + $0x170] sm:$0xff]
    %v329 = vld [vmem:[#allocation8 + $0x178] sm:$0xf]
    %v330 = vld [vmem:[#allocation8 + $0x17c] sm:$0xff]
    %v331 = vld [vmem:[#allocation8 + $0x184] sm:$0xff]
    %v332 = vld [vmem:[#allocation8 + $0x18c] sm:$0xf]
    %v333 = vld [vmem:[#allocation8 + $0x190] sm:$0xff]
    %v334 = vld [vmem:[#allocation8 + $0x198] sm:$0xff]
    %v335 = vld [vmem:[#allocation8 + $0x1a0] sm:$0xf]
    %v336 = vld [vmem:[#allocation8 + $0x1a4] sm:$0xff]
    %v337 = vld [vmem:[#allocation8 + $0x1ac] sm:$0xff]
    %v338 = vld [vmem:[#allocation8 + $0x1b4] sm:$0xf]
    %v339 = vld [vmem:[#allocation8 + $0x1b8] sm:$0xff]
    %v340 = vld [vmem:[#allocation8 + $0x1c0] sm:$0xff]
    %v341 = vld [vmem:[#allocation8 + $0x1c8] sm:$0xf]
    %v342 = vld [vmem:[#allocation8 + $0x1cc] sm:$0xff]
    %v343 = vld [vmem:[#allocation8 + $0x1d4] sm:$0xff]
    %v344 = vld [vmem:[#allocation8 + $0x1dc] sm:$0xf]
    %v345 = vld [vmem:[#allocation8 + $0x1e0] sm:$0xff]
    %v346 = vld [vmem:[#allocation8 + $0x1e8] sm:$0xff]
    %v347 = vld [vmem:[#allocation8 + $0x1f0] sm:$0xf]
    %v348 = vld [vmem:[#allocation8 + $0x1f4] sm:$0xff]
    %v349 = vld [vmem:[#allocation8 + $0x1fc] sm:$0xff]
    %v350 = vld [vmem:[#allocation8 + $0x204] sm:$0xf]
    %v351 = vld [vmem:[#allocation8 + $0x208] sm:$0xff]
    %v352 = vld [vmem:[#allocation8 + $0x210] sm:$0xff]
    %v353 = vld [vmem:[#allocation8 + $0x218] sm:$0xf]
    %v354 = vld [vmem:[#allocation8 + $0x21c] sm:$0xff]
    %v355 = vld [vmem:[#allocation8 + $0x224] sm:$0xff]
    %v356 = vld [vmem:[#allocation8 + $0x22c] sm:$0xf]
    %v357 = vld [vmem:[#allocation8 + $0x230] sm:$0xff]
    %v358 = vld [vmem:[#allocation8 + $0x238] sm:$0xff]
    %v359 = vld [vmem:[#allocation8 + $0x240] sm:$0xf]
    %v360 = vld [vmem:[#allocation8 + $0x244] sm:$0xff]
    %v361 = vld [vmem:[#allocation8 + $0x24c] sm:$0xff]
    %v362 = vld [vmem:[#allocation8 + $0x254] sm:$0xf]
    %v363 = vld [vmem:[#allocation8 + $0x258] sm:$0xff]
    %v364 = vld [vmem:[#allocation8 + $0x260] sm:$0xff]
    %v365 = vld [vmem:[#allocation8 + $0x268] sm:$0xf]
    %v366 = vld [vmem:[#allocation8 + $0x26c] sm:$0xff]
    %v367 = vld [vmem:[#allocation8 + $0x274] sm:$0xff]
    %v368 = vld [vmem:[#allocation8 + $0x27c] sm:$0xf]
    %v369 = vld [vmem:[#allocation8 + $0x280] sm:$0xff]
    %v370 = vld [vmem:[#allocation8 + $0x288] sm:$0xff]
    %v371 = vld [vmem:[#allocation8 + $0x290] sm:$0xf]
    %v372 = vld [vmem:[#allocation8 + $0x294] sm:$0xff]
    %v373 = vld [vmem:[#allocation8 + $0x29c] sm:$0xff]
    %v374 = vld [vmem:[#allocation8 + $0x2a4] sm:$0xf]
    %v375 = vld [vmem:[#allocation8 + $0x2a8] sm:$0xff]
    %v376 = vld [vmem:[#allocation8 + $0x2b0] sm:$0xff]
    %v377 = vld [vmem:[#allocation8 + $0x2b8] sm:$0xf]
    %v378 = vld [vmem:[#allocation8 + $0x2bc] sm:$0xff]
    %v379 = vld [vmem:[#allocation8 + $0x2c4] sm:$0xff]
    %v380 = vld [vmem:[#allocation8 + $0x2cc] sm:$0xf]
    %v381 = vld [vmem:[#allocation8 + $0x2d0] sm:$0xff]
    %v382 = vld [vmem:[#allocation8 + $0x2d8] sm:$0xff]
    %v383 = vld [vmem:[#allocation8 + $0x2e0] sm:$0xf]
    %v384 = vld [vmem:[#allocation8 + $0x2e4] sm:$0xff]
    %v385 = vld [vmem:[#allocation8 + $0x2ec] sm:$0xff]
    %v386 = vld [vmem:[#allocation8 + $0x2f4] sm:$0xf]
    %v387 = vld [vmem:[#allocation8 + $0x2f8] sm:$0xff]
    %v388 = vld [vmem:[#allocation8 + $0x300] sm:$0xff]
    %v389 = vld [vmem:[#allocation8 + $0x308] sm:$0xf]
    %v390 = vld [vmem:[#allocation8 + $0x30c] sm:$0xff]
    %v391 = vld [vmem:[#allocation8 + $0x314] sm:$0xff]
    %v392 = vld [vmem:[#allocation8 + $0x31c] sm:$0xf]
    %v393 = vld [vmem:[#allocation8 + $0x320] sm:$0xff]
    %v394 = vld [vmem:[#allocation8 + $0x328] sm:$0xff]
    %v395 = vld [vmem:[#allocation8 + $0x330] sm:$0xf]
    %v396 = vld [vmem:[#allocation8 + $0x334] sm:$0xff]
    %v397 = vld [vmem:[#allocation8 + $0x33c] sm:$0xff]
    %v398 = vld [vmem:[#allocation8 + $0x344] sm:$0xf]
    %v399 = vld [vmem:[#allocation8 + $0x348] sm:$0xff]
    %v400 = vld [vmem:[#allocation8 + $0x350] sm:$0xff]
    %v401 = vld [vmem:[#allocation8 + $0x358] sm:$0xf]
    %v402 = vld [vmem:[#allocation8 + $0x35c] sm:$0xff]
    %v403 = vld [vmem:[#allocation8 + $0x364] sm:$0xff]
    %v404 = vld [vmem:[#allocation8 + $0x36c] sm:$0xf]
    %v405 = vld [vmem:[#allocation8 + $0x370] sm:$0xff]
    %v406 = vld [vmem:[#allocation8 + $0x378] sm:$0xff]
    %v407 = vld [vmem:[#allocation8 + $0x380] sm:$0xf]
    %v408 = vld [vmem:[#allocation8 + $0x384] sm:$0xff]
    %v409 = vld [vmem:[#allocation8 + $0x38c] sm:$0xff]
    %v410 = vld [vmem:[#allocation8 + $0x394] sm:$0xf]
    %v411 = vld [vmem:[#allocation8 + $0x398] sm:$0xff]
    %v412 = vld [vmem:[#allocation8 + $0x3a0] sm:$0xff]
    %v413 = vld [vmem:[#allocation8 + $0x3a8] sm:$0xf]
    %v414 = vld [vmem:[#allocation8 + $0x3ac] sm:$0xff]
    %v415 = vld [vmem:[#allocation8 + $0x3b4] sm:$0xff]
    %v416 = vld [vmem:[#allocation8 + $0x3bc] sm:$0xf]
    %v417 = vld [vmem:[%s6] sm:$0x1f]
    %v419 = vperm.slane %v417, 0
    %v420 = vperm.slane %v417, 1
    %v421 = vperm.slane %v417, 2
    %v422 = vperm.slane %v417, 3
    %v423 = vperm.slane %v417, 4
    %v573 = vunpack.c.l.b16 %v273
    %v574 = vunpack.c.h.b16 %v273
    %v575 = vunpack.c.l.b16 %v274
    %v576 = vunpack.c.h.b16 %v274
    %v577 = vunpack.c.l.b16 %v275
    %v578 = vunpack.c.l.b16 %v276
    %v579 = vunpack.c.h.b16 %v276
    %v580 = vunpack.c.l.b16 %v277
    %v581 = vunpack.c.h.b16 %v277
    %v582 = vunpack.c.l.b16 %v278
    %v583 = vunpack.c.l.b16 %v279
    %v584 = vunpack.c.h.b16 %v279
    %v585 = vunpack.c.l.b16 %v280
    %v586 = vunpack.c.h.b16 %v280
    %v587 = vunpack.c.l.b16 %v281
    %v588 = vunpack.c.l.b16 %v282
    %v589 = vunpack.c.h.b16 %v282
    %v590 = vunpack.c.l.b16 %v283
    %v591 = vunpack.c.h.b16 %v283
    %v592 = vunpack.c.l.b16 %v284
    %v593 = vunpack.c.l.b16 %v285
    %v594 = vunpack.c.h.b16 %v285
    %v595 = vunpack.c.l.b16 %v286
    %v596 = vunpack.c.h.b16 %v286
    %v597 = vunpack.c.l.b16 %v287
    %v598 = vunpack.c.l.b16 %v288
    %v599 = vunpack.c.h.b16 %v288
    %v600 = vunpack.c.l.b16 %v289
    %v601 = vunpack.c.h.b16 %v289
    %v602 = vunpack.c.l.b16 %v290
    %v603 = vunpack.c.l.b16 %v291
    %v604 = vunpack.c.h.b16 %v291
    %v605 = vunpack.c.l.b16 %v292
    %v606 = vunpack.c.h.b16 %v292
    %v607 = vunpack.c.l.b16 %v293
    %v608 = vunpack.c.l.b16 %v294
    %v609 = vunpack.c.h.b16 %v294
    %v610 = vunpack.c.l.b16 %v295
    %v611 = vunpack.c.h.b16 %v295
    %v612 = vunpack.c.l.b16 %v296
    %v613 = vunpack.c.l.b16 %v297
    %v614 = vunpack.c.h.b16 %v297
    %v615 = vunpack.c.l.b16 %v298
    %v616 = vunpack.c.h.b16 %v298
    %v617 = vunpack.c.l.b16 %v299
    %v618 = vunpack.c.l.b16 %v300
    %v619 = vunpack.c.h.b16 %v300
    %v620 = vunpack.c.l.b16 %v301
    %v621 = vunpack.c.h.b16 %v301
    %v622 = vunpack.c.l.b16 %v302
    %v623 = vunpack.c.l.b16 %v303
    %v624 = vunpack.c.h.b16 %v303
    %v625 = vunpack.c.l.b16 %v304
    %v626 = vunpack.c.h.b16 %v304
    %v627 = vunpack.c.l.b16 %v305
    %v628 = vunpack.c.l.b16 %v306
    %v629 = vunpack.c.h.b16 %v306
    %v630 = vunpack.c.l.b16 %v307
    %v631 = vunpack.c.h.b16 %v307
    %v632 = vunpack.c.l.b16 %v308
    %v633 = vunpack.c.l.b16 %v309
    %v634 = vunpack.c.h.b16 %v309
    %v635 = vunpack.c.l.b16 %v310
    %v636 = vunpack.c.h.b16 %v310
    %v637 = vunpack.c.l.b16 %v311
    %v638 = vunpack.c.l.b16 %v312
    %v639 = vunpack.c.h.b16 %v312
    %v640 = vunpack.c.l.b16 %v313
    %v641 = vunpack.c.h.b16 %v313
    %v642 = vunpack.c.l.b16 %v314
    %v643 = vunpack.c.l.b16 %v315
    %v644 = vunpack.c.h.b16 %v315
    %v645 = vunpack.c.l.b16 %v316
    %v646 = vunpack.c.h.b16 %v316
    %v647 = vunpack.c.l.b16 %v317
    %v648 = vunpack.c.l.b16 %v318
    %v649 = vunpack.c.h.b16 %v318
    %v650 = vunpack.c.l.b16 %v319
    %v651 = vunpack.c.h.b16 %v319
    %v652 = vunpack.c.l.b16 %v320
    %v653 = vunpack.c.l.b16 %v321
    %v654 = vunpack.c.h.b16 %v321
    %v655 = vunpack.c.l.b16 %v322
    %v656 = vunpack.c.h.b16 %v322
    %v657 = vunpack.c.l.b16 %v323
    %v658 = vunpack.c.l.b16 %v324
    %v659 = vunpack.c.h.b16 %v324
    %v660 = vunpack.c.l.b16 %v325
    %v661 = vunpack.c.h.b16 %v325
    %v662 = vunpack.c.l.b16 %v326
    %v663 = vunpack.c.l.b16 %v327
    %v664 = vunpack.c.h.b16 %v327
    %v665 = vunpack.c.l.b16 %v328
    %v666 = vunpack.c.h.b16 %v328
    %v667 = vunpack.c.l.b16 %v329
    %v668 = vunpack.c.l.b16 %v330
    %v669 = vunpack.c.h.b16 %v330
    %v670 = vunpack.c.l.b16 %v331
    %v671 = vunpack.c.h.b16 %v331
    %v672 = vunpack.c.l.b16 %v332
    %v673 = vunpack.c.l.b16 %v333
    %v674 = vunpack.c.h.b16 %v333
    %v675 = vunpack.c.l.b16 %v334
    %v676 = vunpack.c.h.b16 %v334
    %v677 = vunpack.c.l.b16 %v335
    %v678 = vunpack.c.l.b16 %v336
    %v679 = vunpack.c.h.b16 %v336
    %v680 = vunpack.c.l.b16 %v337
    %v681 = vunpack.c.h.b16 %v337
    %v682 = vunpack.c.l.b16 %v338
    %v683 = vunpack.c.l.b16 %v339
    %v684 = vunpack.c.h.b16 %v339
    %v685 = vunpack.c.l.b16 %v340
    %v686 = vunpack.c.h.b16 %v340
    %v687 = vunpack.c.l.b16 %v341
    %v688 = vunpack.c.l.b16 %v342
    %v689 = vunpack.c.h.b16 %v342
    %v690 = vunpack.c.l.b16 %v343
    %v691 = vunpack.c.h.b16 %v343
    %v692 = vunpack.c.l.b16 %v344
    %v693 = vunpack.c.l.b16 %v345
    %v694 = vunpack.c.h.b16 %v345
    %v695 = vunpack.c.l.b16 %v346
    %v696 = vunpack.c.h.b16 %v346
    %v697 = vunpack.c.l.b16 %v347
    %v698 = vunpack.c.l.b16 %v348
    %v699 = vunpack.c.h.b16 %v348
    %v700 = vunpack.c.l.b16 %v349
    %v701 = vunpack.c.h.b16 %v349
    %v702 = vunpack.c.l.b16 %v350
    %v703 = vunpack.c.l.b16 %v351
    %v704 = vunpack.c.h.b16 %v351
    %v705 = vunpack.c.l.b16 %v352
    %v706 = vunpack.c.h.b16 %v352
    %v707 = vunpack.c.l.b16 %v353
    %v708 = vunpack.c.l.b16 %v354
    %v709 = vunpack.c.h.b16 %v354
    %v710 = vunpack.c.l.b16 %v355
    %v711 = vunpack.c.h.b16 %v355
    %v712 = vunpack.c.l.b16 %v356
    %v713 = vunpack.c.l.b16 %v357
    %v714 = vunpack.c.h.b16 %v357
    %v715 = vunpack.c.l.b16 %v358
    %v716 = vunpack.c.h.b16 %v358
    %v717 = vunpack.c.l.b16 %v359
    %v718 = vunpack.c.l.b16 %v360
    %v719 = vunpack.c.h.b16 %v360
    %v720 = vunpack.c.l.b16 %v361
    %v721 = vunpack.c.h.b16 %v361
    %v722 = vunpack.c.l.b16 %v362
    %v723 = vunpack.c.l.b16 %v363
    %v724 = vunpack.c.h.b16 %v363
    %v725 = vunpack.c.l.b16 %v364
    %v726 = vunpack.c.h.b16 %v364
    %v727 = vunpack.c.l.b16 %v365
    %v728 = vunpack.c.l.b16 %v366
    %v729 = vunpack.c.h.b16 %v366
    %v730 = vunpack.c.l.b16 %v367
    %v731 = vunpack.c.h.b16 %v367
    %v732 = vunpack.c.l.b16 %v368
    %v733 = vunpack.c.l.b16 %v369
    %v734 = vunpack.c.h.b16 %v369
    %v735 = vunpack.c.l.b16 %v370
    %v736 = vunpack.c.h.b16 %v370
    %v737 = vunpack.c.l.b16 %v371
    %v738 = vunpack.c.l.b16 %v372
    %v739 = vunpack.c.h.b16 %v372
    %v740 = vunpack.c.l.b16 %v373
    %v741 = vunpack.c.h.b16 %v373
    %v742 = vunpack.c.l.b16 %v374
    %v743 = vunpack.c.l.b16 %v375
    %v744 = vunpack.c.h.b16 %v375
    %v745 = vunpack.c.l.b16 %v376
    %v746 = vunpack.c.h.b16 %v376
    %v747 = vunpack.c.l.b16 %v377
    %v748 = vunpack.c.l.b16 %v378
    %v749 = vunpack.c.h.b16 %v378
    %v750 = vunpack.c.l.b16 %v379
    %v751 = vunpack.c.h.b16 %v379
    %v752 = vunpack.c.l.b16 %v380
    %v753 = vunpack.c.l.b16 %v381
    %v754 = vunpack.c.h.b16 %v381
    %v755 = vunpack.c.l.b16 %v382
    %v756 = vunpack.c.h.b16 %v382
    %v757 = vunpack.c.l.b16 %v383
    %v758 = vunpack.c.l.b16 %v384
    %v759 = vunpack.c.h.b16 %v384
    %v760 = vunpack.c.l.b16 %v385
    %v761 = vunpack.c.h.b16 %v385
    %v762 = vunpack.c.l.b16 %v386
    %v763 = vunpack.c.l.b16 %v387
    %v764 = vunpack.c.h.b16 %v387
    %v765 = vunpack.c.l.b16 %v388
    %v766 = vunpack.c.h.b16 %v388
    %v767 = vunpack.c.l.b16 %v389
    %v768 = vunpack.c.l.b16 %v390
    %v769 = vunpack.c.h.b16 %v390
    %v770 = vunpack.c.l.b16 %v391
    %v771 = vunpack.c.h.b16 %v391
    %v772 = vunpack.c.l.b16 %v392
    %v773 = vunpack.c.l.b16 %v393
    %v774 = vunpack.c.h.b16 %v393
    %v775 = vunpack.c.l.b16 %v394
    %v776 = vunpack.c.h.b16 %v394
    %v777 = vunpack.c.l.b16 %v395
    %v778 = vunpack.c.l.b16 %v396
    %v779 = vunpack.c.h.b16 %v396
    %v780 = vunpack.c.l.b16 %v397
    %v781 = vunpack.c.h.b16 %v397
    %v782 = vunpack.c.l.b16 %v398
    %v783 = vunpack.c.l.b16 %v399
    %v784 = vunpack.c.h.b16 %v399
    %v785 = vunpack.c.l.b16 %v400
    %v786 = vunpack.c.h.b16 %v400
    %v787 = vunpack.c.l.b16 %v401
    %v788 = vunpack.c.l.b16 %v402
    %v789 = vunpack.c.h.b16 %v402
    %v790 = vunpack.c.l.b16 %v403
    %v791 = vunpack.c.h.b16 %v403
    %v792 = vunpack.c.l.b16 %v404
    %v793 = vunpack.c.l.b16 %v405
    %v794 = vunpack.c.h.b16 %v405
    %v795 = vunpack.c.l.b16 %v406
    %v796 = vunpack.c.h.b16 %v406
    %v797 = vunpack.c.l.b16 %v407
    %v798 = vunpack.c.l.b16 %v408
    %v799 = vunpack.c.h.b16 %v408
    %v800 = vunpack.c.l.b16 %v409
    %v801 = vunpack.c.h.b16 %v409
    %v802 = vunpack.c.l.b16 %v410
    %v803 = vunpack.c.l.b16 %v411
    %v804 = vunpack.c.h.b16 %v411
    %v805 = vunpack.c.l.b16 %v412
    %v806 = vunpack.c.h.b16 %v412
    %v807 = vunpack.c.l.b16 %v413
    %v808 = vunpack.c.l.b16 %v414
    %v809 = vunpack.c.h.b16 %v414
    %v810 = vunpack.c.l.b16 %v415
    %v811 = vunpack.c.h.b16 %v415
    %v812 = vunpack.c.l.b16 %v416
    %v813 = vpack.c.b16 %v578, %v573
    %v814 = vpack.c.b16 %v579, %v574
    %v815 = vpack.c.b16 %v580, %v575
    %v816 = vpack.c.b16 %v581, %v576
    %v817 = vpack.c.b16 %v582, %v577
    %v818 = vpack.c.b16 %v588, %v583
    %v819 = vpack.c.b16 %v589, %v584
    %v820 = vpack.c.b16 %v590, %v585
    %v821 = vpack.c.b16 %v591, %v586
    %v822 = vpack.c.b16 %v592, %v587
    %v823 = vpack.c.b16 %v598, %v593
    %v824 = vpack.c.b16 %v599, %v594
    %v825 = vpack.c.b16 %v600, %v595
    %v826 = vpack.c.b16 %v601, %v596
    %v827 = vpack.c.b16 %v602, %v597
    %v828 = vpack.c.b16 %v608, %v603
    %v829 = vpack.c.b16 %v609, %v604
    %v830 = vpack.c.b16 %v610, %v605
    %v831 = vpack.c.b16 %v611, %v606
    %v832 = vpack.c.b16 %v612, %v607
    %v833 = vpack.c.b16 %v618, %v613
    %v834 = vpack.c.b16 %v619, %v614
    %v835 = vpack.c.b16 %v620, %v615
    %v836 = vpack.c.b16 %v621, %v616
    %v837 = vpack.c.b16 %v622, %v617
    %v838 = vpack.c.b16 %v628, %v623
    %v839 = vpack.c.b16 %v629, %v624
    %v840 = vpack.c.b16 %v630, %v625
    %v841 = vpack.c.b16 %v631, %v626
    %v842 = vpack.c.b16 %v632, %v627
    %v843 = vpack.c.b16 %v638, %v633
    %v844 = vpack.c.b16 %v639, %v634
    %v845 = vpack.c.b16 %v640, %v635
    %v846 = vpack.c.b16 %v641, %v636
    %v847 = vpack.c.b16 %v642, %v637
    %v848 = vpack.c.b16 %v648, %v643
    %v849 = vpack.c.b16 %v649, %v644
    %v850 = vpack.c.b16 %v650, %v645
    %v851 = vpack.c.b16 %v651, %v646
    %v852 = vpack.c.b16 %v652, %v647
    %v853 = vpack.c.b16 %v658, %v653
    %v854 = vpack.c.b16 %v659, %v654
    %v855 = vpack.c.b16 %v660, %v655
    %v856 = vpack.c.b16 %v661, %v656
    %v857 = vpack.c.b16 %v662, %v657
    %v858 = vpack.c.b16 %v668, %v663
    %v859 = vpack.c.b16 %v669, %v664
    %v860 = vpack.c.b16 %v670, %v665
    %v861 = vpack.c.b16 %v671, %v666
    %v862 = vpack.c.b16 %v672, %v667
    %v863 = vpack.c.b16 %v678, %v673
    %v864 = vpack.c.b16 %v679, %v674
    %v865 = vpack.c.b16 %v680, %v675
    %v866 = vpack.c.b16 %v681, %v676
    %v867 = vpack.c.b16 %v682, %v677
    %v868 = vpack.c.b16 %v688, %v683
    %v869 = vpack.c.b16 %v689, %v684
    %v870 = vpack.c.b16 %v690, %v685
    %v871 = vpack.c.b16 %v691, %v686
    %v872 = vpack.c.b16 %v692, %v687
    %v873 = vpack.c.b16 %v698, %v693
    %v874 = vpack.c.b16 %v699, %v694
    %v875 = vpack.c.b16 %v700, %v695
    %v876 = vpack.c.b16 %v701, %v696
    %v877 = vpack.c.b16 %v702, %v697
    %v878 = vpack.c.b16 %v708, %v703
    %v879 = vpack.c.b16 %v709, %v704
    %v880 = vpack.c.b16 %v710, %v705
    %v881 = vpack.c.b16 %v711, %v706
    %v882 = vpack.c.b16 %v712, %v707
    %v883 = vpack.c.b16 %v718, %v713
    %v884 = vpack.c.b16 %v719, %v714
    %v885 = vpack.c.b16 %v720, %v715
    %v886 = vpack.c.b16 %v721, %v716
    %v887 = vpack.c.b16 %v722, %v717
    %v888 = vpack.c.b16 %v728, %v723
    %v889 = vpack.c.b16 %v729, %v724
    %v890 = vpack.c.b16 %v730, %v725
    %v891 = vpack.c.b16 %v731, %v726
    %v892 = vpack.c.b16 %v732, %v727
    %v893 = vpack.c.b16 %v738, %v733
    %v894 = vpack.c.b16 %v739, %v734
    %v895 = vpack.c.b16 %v740, %v735
    %v896 = vpack.c.b16 %v741, %v736
    %v897 = vpack.c.b16 %v742, %v737
    %v898 = vpack.c.b16 %v748, %v743
    %v899 = vpack.c.b16 %v749, %v744
    %v900 = vpack.c.b16 %v750, %v745
    %v901 = vpack.c.b16 %v751, %v746
    %v902 = vpack.c.b16 %v752, %v747
    %v903 = vpack.c.b16 %v758, %v753
    %v904 = vpack.c.b16 %v759, %v754
    %v905 = vpack.c.b16 %v760, %v755
    %v906 = vpack.c.b16 %v761, %v756
    %v907 = vpack.c.b16 %v762, %v757
    %v908 = vpack.c.b16 %v768, %v763
    %v909 = vpack.c.b16 %v769, %v764
    %v910 = vpack.c.b16 %v770, %v765
    %v911 = vpack.c.b16 %v771, %v766
    %v912 = vpack.c.b16 %v772, %v767
    %v913 = vpack.c.b16 %v778, %v773
    %v914 = vpack.c.b16 %v779, %v774
    %v915 = vpack.c.b16 %v780, %v775
    %v916 = vpack.c.b16 %v781, %v776
    %v917 = vpack.c.b16 %v782, %v777
    %v918 = vpack.c.b16 %v788, %v783
    %v919 = vpack.c.b16 %v789, %v784
    %v920 = vpack.c.b16 %v790, %v785
    %v921 = vpack.c.b16 %v791, %v786
    %v922 = vpack.c.b16 %v792, %v787
    %v923 = vpack.c.b16 %v798, %v793
    %v924 = vpack.c.b16 %v799, %v794
    %v925 = vpack.c.b16 %v800, %v795
    %v926 = vpack.c.b16 %v801, %v796
    %v927 = vpack.c.b16 %v802, %v797
    %v928 = vpack.c.b16 %v808, %v803
    %v929 = vpack.c.b16 %v809, %v804
    %v930 = vpack.c.b16 %v810, %v805
    %v931 = vpack.c.b16 %v811, %v806
    %v932 = vpack.c.b16 %v812, %v807
    %1053 = vmatpush.bf16.msra.mxu0 %v848
    %1054 = vmatpush.bf16.msra.mxu0 %v843
    %1055 = vmatpush.bf16.msra.mxu0 %v838
    %1056 = vmatpush.bf16.msra.mxu0 %v833
    %1057 = vmatpush.bf16.msra.mxu0 %v828
    %1058 = vmatpush.bf16.msra.mxu0 %v823
    %1059 = vmatpush.bf16.msra.mxu0 %v818
    %1060 = vmatpush.bf16.msra.mxu0 %v813
    %1061 = vmatmul.bf16.gmra.mxu0 %v270
    %v1062 = vpop.f32.mrf.mxu0
    %v1063 = vadd.f32 %v419, %v1062
    %v1064 = vpop.f32.mrf.mxu0
    %1065 = vdwg.mxu0
    %1066 = vmatpush.bf16.msra.mxu0 %v888
    %1067 = vmatpush.bf16.msra.mxu0 %v883
    %1068 = vmatpush.bf16.msra.mxu0 %v878
    %1069 = vmatpush.bf16.msra.mxu0 %v873
    %1070 = vmatpush.bf16.msra.mxu0 %v868
    %1071 = vmatpush.bf16.msra.mxu0 %v863
    %1072 = vmatpush.bf16.msra.mxu0 %v858
    %1073 = vmatpush.bf16.msra.mxu0 %v853
    %1074 = vmatmul.bf16.gmra.mxu0 %v271
    %v1075 = vpop.f32.mrf.mxu0
    %v1076 = vadd.f32 %v1063, %v1075
    %v1077 = vpop.f32.mrf.mxu0
    %1078 = vdwg.mxu0
    %1079 = vmatpush.bf16.msra.mxu0 %v928
    %1080 = vmatpush.bf16.msra.mxu0 %v923
    %1081 = vmatpush.bf16.msra.mxu0 %v918
    %1082 = vmatpush.bf16.msra.mxu0 %v913
    %1083 = vmatpush.bf16.msra.mxu0 %v908
    %1084 = vmatpush.bf16.msra.mxu0 %v903
    %1085 = vmatpush.bf16.msra.mxu0 %v898
    %1086 = vmatpush.bf16.msra.mxu0 %v893
    %1087 = vmatmul.bf16.gmra.mxu0 %v272
    %v1088 = vpop.f32.mrf.mxu0
    %v1089 = vadd.f32 %v1076, %v1088
    %v1090 = vpop.f32.mrf.mxu0
    %1091 = vdwg.mxu0
    %1092 = vmatpush.bf16.msra.mxu0 %v849
    %1093 = vmatpush.bf16.msra.mxu0 %v844
    %1094 = vmatpush.bf16.msra.mxu0 %v839
    %1095 = vmatpush.bf16.msra.mxu0 %v834
    %1096 = vmatpush.bf16.msra.mxu0 %v829
    %1097 = vmatpush.bf16.msra.mxu0 %v824
    %1098 = vmatpush.bf16.msra.mxu0 %v819
    %1099 = vmatpush.bf16.msra.mxu0 %v814
    %1100 = vmatmul.bf16.gmra.mxu0 %v270
    %v1101 = vpop.f32.mrf.mxu0
    %v1102 = vadd.f32 %v420, %v1101
    %v1103 = vpop.f32.mrf.mxu0
    %1104 = vdwg.mxu0
    %1105 = vmatpush.bf16.msra.mxu0 %v889
    %1106 = vmatpush.bf16.msra.mxu0 %v884
    %1107 = vmatpush.bf16.msra.mxu0 %v879
    %1108 = vmatpush.bf16.msra.mxu0 %v874
    %1109 = vmatpush.bf16.msra.mxu0 %v869
    %1110 = vmatpush.bf16.msra.mxu0 %v864
    %1111 = vmatpush.bf16.msra.mxu0 %v859
    %1112 = vmatpush.bf16.msra.mxu0 %v854
    %1113 = vmatmul.bf16.gmra.mxu0 %v271
    %v1114 = vpop.f32.mrf.mxu0
    %v1115 = vadd.f32 %v1102, %v1114
    %v1116 = vpop.f32.mrf.mxu0
    %1117 = vdwg.mxu0
    %1118 = vmatpush.bf16.msra.mxu0 %v929
    %1119 = vmatpush.bf16.msra.mxu0 %v924
    %1120 = vmatpush.bf16.msra.mxu0 %v919
    %1121 = vmatpush.bf16.msra.mxu0 %v914
    %1122 = vmatpush.bf16.msra.mxu0 %v909
    %1123 = vmatpush.bf16.msra.mxu0 %v904
    %1124 = vmatpush.bf16.msra.mxu0 %v899
    %1125 = vmatpush.bf16.msra.mxu0 %v894
    %1126 = vmatmul.bf16.gmra.mxu0 %v272
    %v1127 = vpop.f32.mrf.mxu0
    %v1128 = vadd.f32 %v1115, %v1127
    %v1129 = vpop.f32.mrf.mxu0
    %1130 = vdwg.mxu0
    %1131 = vmatpush.bf16.msra.mxu0 %v850
    %1132 = vmatpush.bf16.msra.mxu0 %v845
    %1133 = vmatpush.bf16.msra.mxu0 %v840
    %1134 = vmatpush.bf16.msra.mxu0 %v835
    %1135 = vmatpush.bf16.msra.mxu0 %v830
    %1136 = vmatpush.bf16.msra.mxu0 %v825
    %1137 = vmatpush.bf16.msra.mxu0 %v820
    %1138 = vmatpush.bf16.msra.mxu0 %v815
    %1139 = vmatmul.bf16.gmra.mxu0 %v270
    %v1140 = vpop.f32.mrf.mxu0
    %v1141 = vadd.f32 %v421, %v1140
    %v1142 = vpop.f32.mrf.mxu0
    %1143 = vdwg.mxu0
    %1144 = vmatpush.bf16.msra.mxu0 %v890
    %1145 = vmatpush.bf16.msra.mxu0 %v885
    %1146 = vmatpush.bf16.msra.mxu0 %v880
    %1147 = vmatpush.bf16.msra.mxu0 %v875
    %1148 = vmatpush.bf16.msra.mxu0 %v870
    %1149 = vmatpush.bf16.msra.mxu0 %v865
    %1150 = vmatpush.bf16.msra.mxu0 %v860
    %1151 = vmatpush.bf16.msra.mxu0 %v855
    %1152 = vmatmul.bf16.gmra.mxu0 %v271
    %v1153 = vpop.f32.mrf.mxu0
    %v1154 = vadd.f32 %v1141, %v1153
    %v1155 = vpop.f32.mrf.mxu0
    %1156 = vdwg.mxu0
    %1157 = vmatpush.bf16.msra.mxu0 %v930
    %1158 = vmatpush.bf16.msra.mxu0 %v925
    %1159 = vmatpush.bf16.msra.mxu0 %v920
    %1160 = vmatpush.bf16.msra.mxu0 %v915
    %1161 = vmatpush.bf16.msra.mxu0 %v910
    %1162 = vmatpush.bf16.msra.mxu0 %v905
    %1163 = vmatpush.bf16.msra.mxu0 %v900
    %1164 = vmatpush.bf16.msra.mxu0 %v895
    %1165 = vmatmul.bf16.gmra.mxu0 %v272
    %v1166 = vpop.f32.mrf.mxu0
    %v1167 = vadd.f32 %v1154, %v1166
    %v1168 = vpop.f32.mrf.mxu0
    %1169 = vdwg.mxu0
    %1170 = vmatpush.bf16.msra.mxu0 %v851
    %1171 = vmatpush.bf16.msra.mxu0 %v846
    %1172 = vmatpush.bf16.msra.mxu0 %v841
    %1173 = vmatpush.bf16.msra.mxu0 %v836
    %1174 = vmatpush.bf16.msra.mxu0 %v831
    %1175 = vmatpush.bf16.msra.mxu0 %v826
    %1176 = vmatpush.bf16.msra.mxu0 %v821
    %1177 = vmatpush.bf16.msra.mxu0 %v816
    %1178 = vmatmul.bf16.gmra.mxu0 %v270
    %v1179 = vpop.f32.mrf.mxu0
    %v1180 = vadd.f32 %v422, %v1179
    %v1181 = vpop.f32.mrf.mxu0
    %1182 = vdwg.mxu0
    %1183 = vmatpush.bf16.msra.mxu0 %v891
    %1184 = vmatpush.bf16.msra.mxu0 %v886
    %1185 = vmatpush.bf16.msra.mxu0 %v881
    %1186 = vmatpush.bf16.msra.mxu0 %v876
    %1187 = vmatpush.bf16.msra.mxu0 %v871
    %1188 = vmatpush.bf16.msra.mxu0 %v866
    %1189 = vmatpush.bf16.msra.mxu0 %v861
    %1190 = vmatpush.bf16.msra.mxu0 %v856
    %1191 = vmatmul.bf16.gmra.mxu0 %v271
    %v1192 = vpop.f32.mrf.mxu0
    %v1193 = vadd.f32 %v1180, %v1192
    %v1194 = vpop.f32.mrf.mxu0
    %1195 = vdwg.mxu0
    %1196 = vmatpush.bf16.msra.mxu0 %v931
    %1197 = vmatpush.bf16.msra.mxu0 %v926
    %1198 = vmatpush.bf16.msra.mxu0 %v921
    %1199 = vmatpush.bf16.msra.mxu0 %v916
    %1200 = vmatpush.bf16.msra.mxu0 %v911
    %1201 = vmatpush.bf16.msra.mxu0 %v906
    %1202 = vmatpush.bf16.msra.mxu0 %v901
    %1203 = vmatpush.bf16.msra.mxu0 %v896
    %1204 = vmatmul.bf16.gmra.mxu0 %v272
    %v1205 = vpop.f32.mrf.mxu0
    %v1206 = vadd.f32 %v1193, %v1205
    %v1207 = vpop.f32.mrf.mxu0
    %1208 = vdwg.mxu0
    %1209 = vmatpush.bf16.msra.mxu0 %v852
    %1210 = vmatpush.bf16.msra.mxu0 %v847
    %1211 = vmatpush.bf16.msra.mxu0 %v842
    %1212 = vmatpush.bf16.msra.mxu0 %v837
    %1213 = vmatpush.bf16.msra.mxu0 %v832
    %1214 = vmatpush.bf16.msra.mxu0 %v827
    %1215 = vmatpush.bf16.msra.mxu0 %v822
    %1216 = vmatpush.bf16.msra.mxu0 %v817
    %1217 = vmatmul.bf16.gmra.mxu0 %v270
    %v1218 = vpop.f32.mrf.mxu0
    %v1219 = vadd.f32 %v423, %v1218
    %v1220 = vpop.f32.mrf.mxu0
    %1221 = vdwg.mxu0
    %1222 = vmatpush.bf16.msra.mxu0 %v892
    %1223 = vmatpush.bf16.msra.mxu0 %v887
    %1224 = vmatpush.bf16.msra.mxu0 %v882
    %1225 = vmatpush.bf16.msra.mxu0 %v877
    %1226 = vmatpush.bf16.msra.mxu0 %v872
    %1227 = vmatpush.bf16.msra.mxu0 %v867
    %1228 = vmatpush.bf16.msra.mxu0 %v862
    %1229 = vmatpush.bf16.msra.mxu0 %v857
    %1230 = vmatmul.bf16.gmra.mxu0 %v271
    %v1231 = vpop.f32.mrf.mxu0
    %v1232 = vadd.f32 %v1219, %v1231
    %v1233 = vpop.f32.mrf.mxu0
    %1234 = vdwg.mxu0
    %1235 = vmatpush.bf16.msra.mxu0 %v932
    %1236 = vmatpush.bf16.msra.mxu0 %v927
    %1237 = vmatpush.bf16.msra.mxu0 %v922
    %1238 = vmatpush.bf16.msra.mxu0 %v917
    %1239 = vmatpush.bf16.msra.mxu0 %v912
    %1240 = vmatpush.bf16.msra.mxu0 %v907
    %1241 = vmatpush.bf16.msra.mxu0 %v902
    %1242 = vmatpush.bf16.msra.mxu0 %v897
    %1243 = vmatmul.bf16.gmra.mxu0 %v272
    %v1244 = vpop.f32.mrf.mxu0
    %v1245 = vadd.f32 %v1232, %v1244
    %v1246 = vpop.f32.mrf.mxu0
    %1247 = vdwg.mxu0
    %v1248 = vmax.f32 %v1089, 0.0
    %v1249 = vmax.f32 %v1128, 0.0
    %v1250 = vmax.f32 %v1167, 0.0
    %v1251 = vmax.f32 %v1206, 0.0
    %v1252 = vmax.f32 %v1245, 0.0
    %v1253 = vld [vmem:[#allocation10] sm:$0x1f]
    %v1254 = vunpack.c.l.bf16 %v1253
    %v1255 = vunpack.c.h.bf16 %v1253
    %v1258 = vperm.slane %v1254, 0
    %v1259 = vperm.slane %v1254, 2
    %v1260 = vperm.slane %v1254, 4
    %v1261 = vperm.slane %v1254, 6
    %v1262 = vperm.slane %v1255, 0
    %v1268 = vperm.slane %v1258, 0
    %v1269 = vperm.slane %v1259, 0
    %v1270 = vperm.slane %v1260, 0
    %v1271 = vperm.slane %v1261, 0
    %v1272 = vperm.slane %v1262, 0
    %v1273 = vmul.f32 %v1248, %v1268
    %v1274 = vmul.f32 %v1249, %v1269
    %v1275 = vmul.f32 %v1250, %v1270
    %v1276 = vmul.f32 %v1251, %v1271
    %v1277 = vmul.f32 %v1252, %v1272
    %v1278 = vadd.f32 %v1273, %v1274
    %v1279 = vadd.f32 %v1278, %v1275
    %v1280 = vadd.f32 %v1279, %v1276
    %v1281 = vadd.f32 %v1280, %v1277
    %1282 = vadd.xlane.f32.xlu0 %v1281
    %v1283 = vpop.xlane.xlu0 %1282
    %s1284 = sld [smem:[#allocation2]]
    %v1285 = vstv %s1284
    %v1286 = vadd.f32 %v1283, %v1285
    %vm1287 = vcmask 7168
    %1288 = vst.msk [vmem:[%s9] sm:$0xff] %vm1287, %v1286
    // Predicated region
    $region58: #{tpu_custom_call.1} parent=1 // pred_check
      _
    $region59: #{tpu_custom_call.1} parent=1 // pred_check_branch
      %1290 = sbr.rel (0) target = $region61
    $region60: #{tpu_custom_call.1} parent=1 // pred_region
      _
    $region61: #{tpu_custom_call.1} parent=1 // pred_fallthru
      _
    // Predicated region
    $region62: #{tpu_custom_call.1} parent=1 // pred_check
      _
    $region63: #{tpu_custom_call.1} parent=1 // pred_check_branch
      %1292 = sbr.rel (0) target = $region65
    $region64: #{tpu_custom_call.1} parent=1 // pred_region
      _
    $region65: #{tpu_custom_call.1} parent=1 // pred_fallthru
      _
    %1293 = vsyncpa [#allocation4], 1
    %1294 = vsyncpa [#allocation6], 1
    %1295 = vsyncpa [#allocation9], 1

</llo_original>
